<compile_context>
chip_gen: v7x
topology: tpu7x:2x2x1
jax: 0.10.0
libtpu: 0.0.40
codegen_flags: <defaults>
</compile_context>

<pallas_src>
import functools
import math

import numpy as np
import jax
import jax.numpy as jnp
from jax.experimental import pallas as pl
from jax.experimental.pallas import tpu as pltpu


# ----------------------------------------------------------------------------
# Tiny probe: determine pltpu.roll's rotation convention once (vs. np.roll).
# ----------------------------------------------------------------------------
_ROLL_MATCHES_NP = None


def _roll_probe_kernel(x_ref, o_ref):
    o_ref[...] = pltpu.roll(x_ref[...], 1, 1)


def _roll_matches_np():
    global _ROLL_MATCHES_NP
    if _ROLL_MATCHES_NP is None:
        try:
            x = jnp.broadcast_to(jnp.arange(128, dtype=jnp.float32)[None, :], (8, 128))
            y = pl.pallas_call(
                _roll_probe_kernel,
                out_shape=jax.ShapeDtypeStruct((8, 128), jnp.float32),
            )(x)
            # np.roll(arange, 1) puts element 0 at index 1.
            _ROLL_MATCHES_NP = bool(float(np.asarray(y)[0, 1]) == 0.0)
        except Exception:
            _ROLL_MATCHES_NP = True
    return _ROLL_MATCHES_NP


# ----------------------------------------------------------------------------
# Pallas kernel: fused (q,k) projection + interleaved RoPE
# ----------------------------------------------------------------------------
def rope_proj_kernel(x_ref, w_ref, b_ref, cos_ref, sin_ref, o_ref, *,
                     hdim, bwd_shift, fwd_shift):
    # x_ref:   (tq, H)     activation tile (batch dim squeezed)
    # w_ref:   (H, tn)     bf16 folded + lane-padded q/k weight tile
    # b_ref:   (1, tn)     f32 folded + padded bias tile
    # cos_ref: (tq, g)     lane-dense per-head cos, period g = lcm(hdim, 128)
    # sin_ref: (tq, g)     lane-dense signed sin (negative on first half-head)
    # o_ref:   (tq, tn)
    half = hdim // 2
    g = cos_ref.shape[-1]
    tn = o_ref.shape[-1]
    rep = tn // g

    # Projection on the MXU: bf16 operands, f32 accumulation.
    xv = x_ref[...].astype(jnp.bfloat16)           # no-op if x is already bf16
    qk = jnp.dot(xv, w_ref[...], preferred_element_type=jnp.float32)
    qk = qk + b_ref[...]                            # (tq, tn) f32

    cos = cos_ref[...]
    sin = sin_ref[...]
    if rep > 1:
        cos = jnp.tile(cos, (1, rep))
        sin = jnp.tile(sin, (1, rep))

    # rotate_half per head via two whole-row XLU lane rotations:
    #   look_bwd[c] = qk[c - half]   (used at second-half columns)
    #   look_fwd[c] = qk[c + half]   (used at first-half columns, sign in sin)
    # Any circular wrap lands only on columns where the other branch is
    # selected (heads tile the row exactly), so the result is the per-head
    # rotate_half — including the all-zero virtual padding heads.
    look_bwd = pltpu.roll(qk, bwd_shift, 1)
    look_fwd = pltpu.roll(qk, fwd_shift, 1)
    col = jax.lax.broadcasted_iota(jnp.int32, qk.shape, 1)
    second_half = (col % hdim) >= half
    rot = jnp.where(second_half, look_bwd, look_fwd)

    o_ref[...] = (qk * cos + rot * sin).astype(o_ref.dtype)


# ----------------------------------------------------------------------------
# Wrapper
# ----------------------------------------------------------------------------
def ds_model_pallas(x, wq, bq, wk, bk, cos_cached, sin_cached, n_head, n_kv, hdim,
                    out_dtype=None, return_padded=False):
    b, s, hidden = x.shape
    half = hdim // 2
    n_total = n_head + n_kv
    D = n_total * hdim
    out_dtype = x.dtype if out_dtype is None else out_dtype

    # ---- glue: fold the per-head de-interleave permutation into the weights ----
    perm_head = np.concatenate([np.arange(0, hdim, 2), np.arange(1, hdim, 2)])

    def permute_cols(w, bias, nh):
        perm = (np.arange(nh)[:, None] * hdim + perm_head[None, :]).reshape(-1)
        return w[:, perm], bias[perm]

    wq_p, bq_p = permute_cols(wq, bq, n_head)
    wk_p, bk_p = permute_cols(wk, bk, n_kv)
    w_cat = jnp.concatenate([wq_p, wk_p], axis=1)              # (H, D)
    b_cat = jnp.concatenate([bq_p, bk_p])                      # (D,)

    # ---- lane-dense padding of the output dim with whole zero "virtual heads" ----
    LANE = 128
    g = hdim * LANE // math.gcd(hdim, LANE)                    # lcm(hdim, 128)
    Dp = D if D % LANE == 0 else ((D + g - 1) // g) * g        # multiple of g either way
    if Dp != D:
        w_cat = jnp.pad(w_cat, ((0, 0), (0, Dp - D)))
        b_cat = jnp.pad(b_cat, (0, Dp - D))
    w_cat = w_cat.astype(jnp.bfloat16)                         # bf16 MXU operands
    b_cat = b_cat[None, :].astype(jnp.float32)                 # (1, Dp) f32

    # ---- cos and signed sin, pre-tiled to a lane-dense period of width g ----
    cos_h = cos_cached[:s].astype(jnp.float32)                 # (S, hdim)
    sin_h = sin_cached[:s].astype(jnp.float32)
    sign = np.where(np.arange(hdim) >= half, 1.0, -1.0).astype(np.float32)[None, :]
    sin_signed = sin_h * sign                                  # -sin on 1st half, +sin on 2nd
    rep_g = g // hdim
    cos_g = jnp.tile(cos_h, (1, rep_g)) if rep_g > 1 else cos_h          # (S, g)
    sin_g = jnp.tile(sin_signed, (1, rep_g)) if rep_g > 1 else sin_signed

    # ---- generation-aware VMEM budget and tile sizes ----
    try:
        phys_vmem = int(getattr(pltpu.get_tpu_info(), "vmem_capacity_bytes"))
    except Exception:
        phys_vmem = 64 * 1024 * 1024                           # conservative fallback
    vmem_limit = min(phys_vmem * 3 // 4, 100 * 1024 * 1024)    # ~96 MiB v5e/v6e, ~48 MiB v7x
    tq_cap = 512 if phys_vmem >= 96 * 1024 * 1024 else 256
    tq = min(s, tq_cap)
    if tq >= 8:
        tq = (tq // 8) * 8
    n_sq = pl.cdiv(s, tq)

    # ---- stream weights along an N axis only when they don't fit comfortably ----
    w_bytes_resident = hidden * Dp * 2                         # bf16, single-buffered
    if w_bytes_resident <= 16 * 1024 * 1024:
        tn = Dp
    else:
        tn = min(Dp, max(g, (1024 // g) * g if g <= 1024 else g))
    n_n = pl.cdiv(Dp, tn)
    weights_resident = (n_n == 1)

    if _roll_matches_np():
        bwd_shift, fwd_shift = half, tn - half                 # [c-half], [c+half]
    else:
        bwd_shift, fwd_shift = tn - half, half

    kernel = functools.partial(rope_proj_kernel, hdim=hdim,
                               bwd_shift=bwd_shift, fwd_shift=fwd_shift)

    def _call(single_buffer_weights):
        w_kwargs = dict(pipeline_mode=pl.Buffered(1)) if single_buffer_weights else {}
        in_specs = [
            # batch dim squeezed out of the kernel ref (None == pl.Squeezed()).
            pl.BlockSpec((None, tq, hidden), lambda si, bi, ni: (bi, si, 0)),
            pl.BlockSpec((hidden, tn), lambda si, bi, ni: (0, ni), **w_kwargs),
            pl.BlockSpec((1, tn), lambda si, bi, ni: (0, ni), **w_kwargs),
            pl.BlockSpec((tq, g), lambda si, bi, ni: (si, 0)),   # cos (const over bi, ni)
            pl.BlockSpec((tq, g), lambda si, bi, ni: (si, 0)),   # signed sin
        ]
        return pl.pallas_call(
            kernel,
            out_shape=jax.ShapeDtypeStruct((b, s, Dp), out_dtype),
            grid=(n_sq, b, n_n),
            in_specs=in_specs,
            out_specs=pl.BlockSpec((None, tq, tn), lambda si, bi, ni: (bi, si, ni)),
            compiler_params=pltpu.CompilerParams(
                dimension_semantics=("parallel", "parallel", "parallel"),
                vmem_limit_bytes=int(vmem_limit),
            ),
        )(x, w_cat, b_cat, cos_g, sin_g)

    if weights_resident:
        try:
            out_p = _call(True)
        except Exception:
            out_p = _call(False)     # runtime rejected Buffered(1): use default buffering
    else:
        out_p = _call(False)

    if return_padded or Dp == D:
        return out_p
    # TODO(synk): let the consumer take the padded (lane-aligned) layout to avoid
    # this extra HBM round trip when Dp != D.
    return out_p[..., :D]


# ----------------------------------------------------------------------------
# Pure-JAX reference mirroring the PyTorch forward (BNSD layout, mode='match')
# ----------------------------------------------------------------------------
def _rotate_half(t):
    h = t.shape[-1] // 2
    return jnp.concatenate([-t[..., h:], t[..., :h]], axis=-1)


def ds_model_ref(x, wq, bq, wk, bk, cos_cached, sin_cached, n_head, n_kv, hdim):
    b, s, _ = x.shape
    hi = jax.lax.Precision.HIGHEST
    q = (jnp.dot(x, wq, precision=hi) + bq).reshape(b, s, n_head, hdim).transpose(0, 2, 1, 3)
    k = (jnp.dot(x, wk, precision=hi) + bk).reshape(b, s, n_kv, hdim).transpose(0, 2, 1, 3)
    cos = cos_cached[:s].astype(x.dtype)
    sin = sin_cached[:s].astype(x.dtype)
    pos_ids = jnp.broadcast_to(jnp.arange(s)[None, :], (b, s))
    cos_e = cos[pos_ids][:, None, :, :]   # unsqueeze_dim = 1 (BNSD)
    sin_e = sin[pos_ids][:, None, :, :]

    def deinterleave(t):  # view(..., d//2, 2).transpose(-1, -2).reshape(..., d)
        bb, h, ss, d = t.shape
        return t.reshape(bb, h, ss, d // 2, 2).transpose(0, 1, 2, 4, 3).reshape(bb, h, ss, d)

    qd, kd = deinterleave(q), deinterleave(k)
    q_emb = qd * cos_e + _rotate_half(qd) * sin_e
    k_emb = kd * cos_e + _rotate_half(kd) * sin_e
    q_out = q_emb.transpose(0, 2, 1, 3).reshape(b, s, -1)
    k_out = k_emb.transpose(0, 2, 1, 3).reshape(b, s, -1)
    return jnp.concatenate([q_out, k_out], axis=-1)


# ----------------------------------------------------------------------------
if __name__ == "__main__":
    # Small shapes consistent with the module: hidden=32, n_head=4, n_kv=2 -> hdim=8
    B, S, HIDDEN = 2, 8, 32
    N_HEAD, N_KV, MAX_SEQ, BASE = 4, 2, 16, 10000
    HDIM = HIDDEN // N_HEAD

    key = jax.random.PRNGKey(0)
    kx, kwq, kbq, kwk, kbk = jax.random.split(key, 5)
    bound = 1.0 / np.sqrt(HIDDEN)
    x = jax.random.normal(kx, (B, S, HIDDEN), dtype=jnp.float32)
    wq = jax.random.uniform(kwq, (HIDDEN, N_HEAD * HDIM), jnp.float32, -bound, bound)
    bq = jax.random.uniform(kbq, (N_HEAD * HDIM,), jnp.float32, -bound, bound)
    wk = jax.random.uniform(kwk, (HIDDEN, N_KV * HDIM), jnp.float32, -bound, bound)
    bk = jax.random.uniform(kbk, (N_KV * HDIM,), jnp.float32, -bound, bound)

    # DSRotaryEmbedding caches
    inv_freq = 1.0 / (BASE ** (jnp.arange(0, HDIM, 2, dtype=jnp.float32) / HDIM))
    t = jnp.arange(MAX_SEQ, dtype=jnp.float32)
    freqs = jnp.outer(t, inv_freq)
    emb = jnp.concatenate([freqs, freqs], axis=-1)
    cos_cached = jnp.cos(emb)
    sin_cached = jnp.sin(emb)

    out = ds_model_pallas(x, wq, bq, wk, bk, cos_cached, sin_cached, N_HEAD, N_KV, HDIM)
    out = jax.block_until_ready(out)

    ref = ds_model_ref(x, wq, bq, wk, bk, cos_cached, sin_cached, N_HEAD, N_KV, HDIM)
    # Tolerance loosened vs. the f32 (HIGHEST-precision) reference because the
    # projection runs with bf16 MXU operands (f32 accumulation).
    np.testing.assert_allclose(np.asarray(out), np.asarray(ref), rtol=2e-2, atol=2e-2)
    assert out.shape == (B, S, (N_HEAD + N_KV) * HDIM)

    print("KERNEL_OK")
</pallas_src>

<mosaic_0001>
module attributes {stable_mosaic.version = 11 : i64} {
  func.func @_roll_probe_kernel(%arg0: memref<8x128xf32, #tpu.memory_space<vmem>>, %arg1: memref<8x128xf32, #tpu.memory_space<vmem>>) attributes {dimension_semantics = [], scalar_prefetch = 0 : i64, scratch_operands = 0 : i64, tpu.core_type = #tpu.core_type<tc>} {
    %c0 = arith.constant 0 : index
    %c0_0 = arith.constant 0 : index
    %0 = vector.load %arg0[%c0, %c0_0] : memref<8x128xf32, #tpu.memory_space<vmem>>, vector<8x128xf32>
    %c1_i32 = arith.constant 1 : i32
    %1 = tpu.dynamic_rotate %0 by %c1_i32 dim 1 : vector<8x128xf32>, i32 -> vector<8x128xf32>
    %c0_1 = arith.constant 0 : index
    %c0_2 = arith.constant 0 : index
    %2 = vector.load %arg1[%c0_1, %c0_2] : memref<8x128xf32, #tpu.memory_space<vmem>>, vector<8x128xf32>
    tpu.vector_store %arg1[%c0_1, %c0_2], %1 {strides = array<i32>} : memref<8x128xf32, #tpu.memory_space<vmem>>, vector<8x128xf32>,
    return
  }
}

module attributes {stable_mosaic.version = 11 : i64} {
  func.func @rope_proj_kernel(%arg0: i32, %arg1: i32, %arg2: i32, %arg3: memref<1x8x32xf32, #tpu.memory_space<vmem>>, %arg4: memref<32x128xbf16, #tpu.memory_space<vmem>>, %arg5: memref<1x128xf32, #tpu.memory_space<vmem>>, %arg6: memref<8x128xf32, #tpu.memory_space<vmem>>, %arg7: memref<8x128xf32, #tpu.memory_space<vmem>>, %arg8: memref<1x8x128xf32, #tpu.memory_space<vmem>>) attributes {dimension_semantics = [#tpu.dimension_semantics<parallel>, #tpu.dimension_semantics<parallel>, #tpu.dimension_semantics<parallel>], iteration_bounds = array<i64: 1, 2, 1>, scalar_prefetch = 0 : i64, scratch_operands = 0 : i64, tpu.core_type = #tpu.core_type<tc>, window_params = [{transform_indices = @transform_0, window_bounds = array<i64: 1, 8, 32>}, {pipeline_mode = #tpu.pipeline_mode<synchronous>, transform_indices = @transform_1, window_bounds = array<i64: 32, 128>}, {pipeline_mode = #tpu.pipeline_mode<synchronous>, transform_indices = @transform_2, window_bounds = array<i64: 1, 128>}, {transform_indices = @transform_3, window_bounds = array<i64: 8, 128>}, {transform_indices = @transform_4, window_bounds = array<i64: 8, 128>}, {transform_indices = @transform_5, window_bounds = array<i64: 1, 8, 128>}]} {
    %c0 = arith.constant 0 : index
    %c0_0 = arith.constant 0 : index
    %c0_1 = arith.constant 0 : index
    %0 = vector.load %arg3[%c0, %c0_0, %c0_1] : memref<1x8x32xf32, #tpu.memory_space<vmem>>, vector<1x8x32xf32>
    %1 = vector.shape_cast %0 : vector<1x8x32xf32> to vector<8x32xf32>
    %2 = arith.truncf %1 : vector<8x32xf32> to vector<8x32xbf16>
    %c0_2 = arith.constant 0 : index
    %c0_3 = arith.constant 0 : index
    %3 = vector.load %arg4[%c0_2, %c0_3] : memref<32x128xbf16, #tpu.memory_space<vmem>>, vector<32x128xbf16>
    %cst = arith.constant dense<0.000000e+00> : vector<8x128xf32>
    %4 = tpu.matmul %2, %3, %cst {dimension_numbers = #tpu.dot_dimension_numbers<[1], [0], [0], [1], [0, 0, 1, 1], [], []>} : vector<8x32xbf16>, vector<32x128xbf16>, vector<8x128xf32> -> vector<8x128xf32>
    %c0_4 = arith.constant 0 : index
    %c0_5 = arith.constant 0 : index
    %5 = vector.load %arg5[%c0_4, %c0_5] : memref<1x128xf32, #tpu.memory_space<vmem>>, vector<1x128xf32>
    %6 = vector.broadcast %5 : vector<1x128xf32> to vector<8x128xf32>
    %7 = arith.addf %4, %6 : vector<8x128xf32>
    %c0_6 = arith.constant 0 : index
    %c0_7 = arith.constant 0 : index
    %8 = vector.load %arg6[%c0_6, %c0_7] : memref<8x128xf32, #tpu.memory_space<vmem>>, vector<8x128xf32>
    %c0_8 = arith.constant 0 : index
    %c0_9 = arith.constant 0 : index
    %9 = vector.load %arg7[%c0_8, %c0_9] : memref<8x128xf32, #tpu.memory_space<vmem>>, vector<8x128xf32>
    %c4_i32 = arith.constant 4 : i32
    %10 = tpu.dynamic_rotate %7 by %c4_i32 dim 1 : vector<8x128xf32>, i32 -> vector<8x128xf32>
    %c124_i32 = arith.constant 124 : i32
    %11 = tpu.dynamic_rotate %7 by %c124_i32 dim 1 : vector<8x128xf32>, i32 -> vector<8x128xf32>
    %12 = tpu.iota {dimensions = array<i32: 1>} : vector<8x128xi32>
    %c8_i32 = arith.constant 8 : i32
    %c0_i32 = arith.constant 0 : i32
    %13 = arith.cmpi eq, %c8_i32, %c0_i32 : i32
    %c1_i32 = arith.constant 1 : i32
    %14 = arith.select %13, %c1_i32, %c8_i32 : i32
    %15 = vector.broadcast %14 : i32 to vector<8x128xi32>
    %16 = arith.remsi %12, %15 : vector<8x128xi32>
    %c0_i32_10 = arith.constant 0 : i32
    %17 = vector.broadcast %c0_i32_10 : i32 to vector<8x128xi32>
    %18 = arith.cmpi ne, %16, %17 : vector<8x128xi32>
    %c0_i32_11 = arith.constant 0 : i32
    %19 = vector.broadcast %c0_i32_11 : i32 to vector<8x128xi32>
    %20 = arith.cmpi slt, %16, %19 : vector<8x128xi32>
    %c0_i32_12 = arith.constant 0 : i32
    %21 = arith.cmpi slt, %14, %c0_i32_12 : i32
    %22 = vector.broadcast %21 : i1 to vector<8x128xi1>
    %23 = vector.broadcast %22 : vector<8x128xi1> to vector<8x128xi1>
    %24 = arith.xori %20, %23 : vector<8x128xi1>
    %25 = arith.andi %24, %18 : vector<8x128xi1>
    %26 = vector.broadcast %14 : i32 to vector<8x128xi32>
    %27 = arith.addi %16, %26 : vector<8x128xi32>
    %28 = arith.select %25, %27, %16 : vector<8x128xi1>, vector<8x128xi32>
    %c4_i32_13 = arith.constant 4 : i32
    %29 = vector.broadcast %c4_i32_13 : i32 to vector<8x128xi32>
    %30 = arith.cmpi sge, %28, %29 : vector<8x128xi32>
    %31 = arith.select %30, %10, %11 : vector<8x128xi1>, vector<8x128xf32>
    %32 = arith.mulf %7, %8 : vector<8x128xf32>
    %33 = arith.mulf %31, %9 : vector<8x128xf32>
    %34 = arith.addf %32, %33 : vector<8x128xf32>
    %c0_14 = arith.constant 0 : index
    %c0_15 = arith.constant 0 : index
    %c0_16 = arith.constant 0 : index
    %35 = vector.load %arg8[%c0_14, %c0_15, %c0_16] : memref<1x8x128xf32, #tpu.memory_space<vmem>>, vector<1x8x128xf32>
    %36 = vector.shape_cast %35 : vector<1x8x128xf32> to vector<8x128xf32>
    %37 = vector.shape_cast %34 : vector<8x128xf32> to vector<1x8x128xf32>
    tpu.vector_store %arg8[%c0_14, %c0_15, %c0_16], %37 {strides = array<i32>} : memref<1x8x128xf32, #tpu.memory_space<vmem>>, vector<1x8x128xf32>,
    return
  }
  func.func @transform_0(%arg0: i32, %arg1: i32, %arg2: i32) -> (i32, i32, i32) {
    %c0_i32 = arith.constant 0 : i32
    %c0_i32_0 = arith.constant 0 : i32
    return %arg1, %arg0, %c0_i32 : i32, i32, i32
  }
  func.func @transform_1(%arg0: i32, %arg1: i32, %arg2: i32) -> (i32, i32) {
    %c0_i32 = arith.constant 0 : i32
    %c0_i32_0 = arith.constant 0 : i32
    return %c0_i32, %arg2 : i32, i32
  }
  func.func @transform_2(%arg0: i32, %arg1: i32, %arg2: i32) -> (i32, i32) {
    %c0_i32 = arith.constant 0 : i32
    %c0_i32_0 = arith.constant 0 : i32
    return %c0_i32, %arg2 : i32, i32
  }
  func.func @transform_3(%arg0: i32, %arg1: i32, %arg2: i32) -> (i32, i32) {
    %c0_i32 = arith.constant 0 : i32
    %c0_i32_0 = arith.constant 0 : i32
    return %arg0, %c0_i32 : i32, i32
  }
  func.func @transform_4(%arg0: i32, %arg1: i32, %arg2: i32) -> (i32, i32) {
    %c0_i32 = arith.constant 0 : i32
    %c0_i32_0 = arith.constant 0 : i32
    return %arg0, %c0_i32 : i32, i32
  }
  func.func @transform_5(%arg0: i32, %arg1: i32, %arg2: i32) -> (i32, i32, i32) {
    %c0_i32 = arith.constant 0 : i32
    return %arg1, %arg0, %arg2 : i32, i32, i32
  }
}

module attributes {stable_mosaic.version = 11 : i64} {
  func.func @rope_proj_kernel(%arg0: i32, %arg1: i32, %arg2: i32, %arg3: memref<1x8x32xf32, #tpu.memory_space<vmem>>, %arg4: memref<32x128xbf16, #tpu.memory_space<vmem>>, %arg5: memref<1x128xf32, #tpu.memory_space<vmem>>, %arg6: memref<8x128xf32, #tpu.memory_space<vmem>>, %arg7: memref<8x128xf32, #tpu.memory_space<vmem>>, %arg8: memref<1x8x128xf32, #tpu.memory_space<vmem>>) attributes {dimension_semantics = [#tpu.dimension_semantics<parallel>, #tpu.dimension_semantics<parallel>, #tpu.dimension_semantics<parallel>], iteration_bounds = array<i64: 1, 2, 1>, scalar_prefetch = 0 : i64, scratch_operands = 0 : i64, tpu.core_type = #tpu.core_type<tc>, window_params = [{transform_indices = @transform_0, window_bounds = array<i64: 1, 8, 32>}, {transform_indices = @transform_1, window_bounds = array<i64: 32, 128>}, {transform_indices = @transform_2, window_bounds = array<i64: 1, 128>}, {transform_indices = @transform_3, window_bounds = array<i64: 8, 128>}, {transform_indices = @transform_4, window_bounds = array<i64: 8, 128>}, {transform_indices = @transform_5, window_bounds = array<i64: 1, 8, 128>}]} {
    %c0 = arith.constant 0 : index
    %c0_0 = arith.constant 0 : index
    %c0_1 = arith.constant 0 : index
    %0 = vector.load %arg3[%c0, %c0_0, %c0_1] : memref<1x8x32xf32, #tpu.memory_space<vmem>>, vector<1x8x32xf32>
    %1 = vector.shape_cast %0 : vector<1x8x32xf32> to vector<8x32xf32>
    %2 = arith.truncf %1 : vector<8x32xf32> to vector<8x32xbf16>
    %c0_2 = arith.constant 0 : index
    %c0_3 = arith.constant 0 : index
    %3 = vector.load %arg4[%c0_2, %c0_3] : memref<32x128xbf16, #tpu.memory_space<vmem>>, vector<32x128xbf16>
    %cst = arith.constant dense<0.000000e+00> : vector<8x128xf32>
    %4 = tpu.matmul %2, %3, %cst {dimension_numbers = #tpu.dot_dimension_numbers<[1], [0], [0], [1], [0, 0, 1, 1], [], []>} : vector<8x32xbf16>, vector<32x128xbf16>, vector<8x128xf32> -> vector<8x128xf32>
    %c0_4 = arith.constant 0 : index
    %c0_5 = arith.constant 0 : index
    %5 = vector.load %arg5[%c0_4, %c0_5] : memref<1x128xf32, #tpu.memory_space<vmem>>, vector<1x128xf32>
    %6 = vector.broadcast %5 : vector<1x128xf32> to vector<8x128xf32>
    %7 = arith.addf %4, %6 : vector<8x128xf32>
    %c0_6 = arith.constant 0 : index
    %c0_7 = arith.constant 0 : index
    %8 = vector.load %arg6[%c0_6, %c0_7] : memref<8x128xf32, #tpu.memory_space<vmem>>, vector<8x128xf32>
    %c0_8 = arith.constant 0 : index
    %c0_9 = arith.constant 0 : index
    %9 = vector.load %arg7[%c0_8, %c0_9] : memref<8x128xf32, #tpu.memory_space<vmem>>, vector<8x128xf32>
    %c4_i32 = arith.constant 4 : i32
    %10 = tpu.dynamic_rotate %7 by %c4_i32 dim 1 : vector<8x128xf32>, i32 -> vector<8x128xf32>
    %c124_i32 = arith.constant 124 : i32
    %11 = tpu.dynamic_rotate %7 by %c124_i32 dim 1 : vector<8x128xf32>, i32 -> vector<8x128xf32>
    %12 = tpu.iota {dimensions = array<i32: 1>} : vector<8x128xi32>
    %c8_i32 = arith.constant 8 : i32
    %c0_i32 = arith.constant 0 : i32
    %13 = arith.cmpi eq, %c8_i32, %c0_i32 : i32
    %c1_i32 = arith.constant 1 : i32
    %14 = arith.select %13, %c1_i32, %c8_i32 : i32
    %15 = vector.broadcast %14 : i32 to vector<8x128xi32>
    %16 = arith.remsi %12, %15 : vector<8x128xi32>
    %c0_i32_10 = arith.constant 0 : i32
    %17 = vector.broadcast %c0_i32_10 : i32 to vector<8x128xi32>
    %18 = arith.cmpi ne, %16, %17 : vector<8x128xi32>
    %c0_i32_11 = arith.constant 0 : i32
    %19 = vector.broadcast %c0_i32_11 : i32 to vector<8x128xi32>
    %20 = arith.cmpi slt, %16, %19 : vector<8x128xi32>
    %c0_i32_12 = arith.constant 0 : i32
    %21 = arith.cmpi slt, %14, %c0_i32_12 : i32
    %22 = vector.broadcast %21 : i1 to vector<8x128xi1>
    %23 = vector.broadcast %22 : vector<8x128xi1> to vector<8x128xi1>
    %24 = arith.xori %20, %23 : vector<8x128xi1>
    %25 = arith.andi %24, %18 : vector<8x128xi1>
    %26 = vector.broadcast %14 : i32 to vector<8x128xi32>
    %27 = arith.addi %16, %26 : vector<8x128xi32>
    %28 = arith.select %25, %27, %16 : vector<8x128xi1>, vector<8x128xi32>
    %c4_i32_13 = arith.constant 4 : i32
    %29 = vector.broadcast %c4_i32_13 : i32 to vector<8x128xi32>
    %30 = arith.cmpi sge, %28, %29 : vector<8x128xi32>
    %31 = arith.select %30, %10, %11 : vector<8x128xi1>, vector<8x128xf32>
    %32 = arith.mulf %7, %8 : vector<8x128xf32>
    %33 = arith.mulf %31, %9 : vector<8x128xf32>
    %34 = arith.addf %32, %33 : vector<8x128xf32>
    %c0_14 = arith.constant 0 : index
    %c0_15 = arith.constant 0 : index
    %c0_16 = arith.constant 0 : index
    %35 = vector.load %arg8[%c0_14, %c0_15, %c0_16] : memref<1x8x128xf32, #tpu.memory_space<vmem>>, vector<1x8x128xf32>
    %36 = vector.shape_cast %35 : vector<1x8x128xf32> to vector<8x128xf32>
    %37 = vector.shape_cast %34 : vector<8x128xf32> to vector<1x8x128xf32>
    tpu.vector_store %arg8[%c0_14, %c0_15, %c0_16], %37 {strides = array<i32>} : memref<1x8x128xf32, #tpu.memory_space<vmem>>, vector<1x8x128xf32>,
    return
  }
  func.func @transform_0(%arg0: i32, %arg1: i32, %arg2: i32) -> (i32, i32, i32) {
    %c0_i32 = arith.constant 0 : i32
    %c0_i32_0 = arith.constant 0 : i32
    return %arg1, %arg0, %c0_i32 : i32, i32, i32
  }
  func.func @transform_1(%arg0: i32, %arg1: i32, %arg2: i32) -> (i32, i32) {
    %c0_i32 = arith.constant 0 : i32
    %c0_i32_0 = arith.constant 0 : i32
    return %c0_i32, %arg2 : i32, i32
  }
  func.func @transform_2(%arg0: i32, %arg1: i32, %arg2: i32) -> (i32, i32) {
    %c0_i32 = arith.constant 0 : i32
    %c0_i32_0 = arith.constant 0 : i32
    return %c0_i32, %arg2 : i32, i32
  }
  func.func @transform_3(%arg0: i32, %arg1: i32, %arg2: i32) -> (i32, i32) {
    %c0_i32 = arith.constant 0 : i32
    %c0_i32_0 = arith.constant 0 : i32
    return %arg0, %c0_i32 : i32, i32
  }
  func.func @transform_4(%arg0: i32, %arg1: i32, %arg2: i32) -> (i32, i32) {
    %c0_i32 = arith.constant 0 : i32
    %c0_i32_0 = arith.constant 0 : i32
    return %arg0, %c0_i32 : i32, i32
  }
  func.func @transform_5(%arg0: i32, %arg1: i32, %arg2: i32) -> (i32, i32, i32) {
    %c0_i32 = arith.constant 0 : i32
    return %arg1, %arg0, %arg2 : i32, i32, i32
  }
}

</mosaic_0001>

<llo_original>
// kernel: tpu_custom_call.1
$region0: #{tpu_custom_call.1}
  #allocation0 [shape = 'u32[]', space=smem, size = 0x4, offset = 0x4, fixed_abs, tag = 'smem constant byte address 0x4 - core index']
  #allocation1 [shape = 'u32[144,128]{1,0:T(1,128)}', space=vmem, size = 0x12000, scoped, tag = 'internal scratch']
  %s0 = inlined_call_operand.hbm [shape: f32[8,128], index: 0, kind: input, shape index: {}]
  %s1 = inlined_call_operand.hbm [shape: f32[8,128], index: 1, kind: output, shape index: {}]
  %s2 = sld [smem:[#allocation0]]
  $region18: #{tpu_custom_call.1} parent=0
    _
  %s4 = ssub.s32 1, %s2
  %s5 = scalar_select 0, %s4, %s2
  $region1: #{tpu_custom_call.1} parent=0
    #allocation2 [shape = 'u8[4096]{0}', space=vmem, size = 0x1000, scoped, tag = 'input window, operand 0, single buffered']
    #allocation3 [shape = 's32[1]{0}', space=sflag, size = 0x4, scoped, tag = 'scoped memory for tpu_custom_call.1']
    #allocation4 [shape = 's32[1]{0}', space=sflag, size = 0x4, scoped, tag = 'scoped memory for tpu_custom_call.1']
    #allocation5 [shape = 'u8[4096]{0}', space=vmem, size = 0x1000, scoped, tag = 'output window, operand 0, single buffered']
    %6 = vsyncpa [#allocation3], 0
    %7 = vsyncpa [#allocation4], 0
    // Predicated region
    $region2: #{tpu_custom_call.1} parent=1 // pred_check
      _
    $region3: #{tpu_custom_call.1} parent=1 // pred_check_branch
      %9 = sbr.rel (0) target = $region5
    $region4: #{tpu_custom_call.1} parent=1 // pred_region
      %s11 = ssub.s32 128, 128
      %12 = vsyncadd [#allocation3], %s11
      %s14 = sshll.u32 [#allocation2], 4
      %s15 = int_to_ptr.vmem [resolvable:$true] %s14
      %17 = dma.hbm_to_vmem [thread:$0]  %s0, 128, %s15, [#allocation3]
    $region5: #{tpu_custom_call.1} parent=1 // pred_fallthru
      _
    // Predicated region
    $region6: #{tpu_custom_call.1} parent=1 // pred_check
      _
    $region7: #{tpu_custom_call.1} parent=1 // pred_check_branch
      %19 = sbr.rel (0) target = $region9
    $region8: #{tpu_custom_call.1} parent=1 // pred_region
      %20 = dma.done [#allocation3], 128
    $region9: #{tpu_custom_call.1} parent=1 // pred_fallthru
      _
    %v21 = vld [vmem:[#allocation2] sm:$0xff]
    %22 = vrot.lane.b32.xlu0 %v21, 1
    %v23 = vpop.permute.xlu0 %22
    %24 = vst [vmem:[#allocation5] sm:$0xff] %v23
    // Predicated region
    $region10: #{tpu_custom_call.1} parent=1 // pred_check
      _
    $region11: #{tpu_custom_call.1} parent=1 // pred_check_branch
      %26 = sbr.rel (0) target = $region13
    $region12: #{tpu_custom_call.1} parent=1 // pred_region
      %s28 = ssub.s32 128, 128
      %29 = vsyncadd [#allocation4], %s28
      %s31 = sshll.u32 [#allocation5], 4
      %s32 = int_to_ptr.vmem [resolvable:$true] %s31
      %34 = dma.vmem_to_hbm [thread:$0]  %s32, 128, %s1, [#allocation4]
    $region13: #{tpu_custom_call.1} parent=1 // pred_fallthru
      _
    // Predicated region
    $region14: #{tpu_custom_call.1} parent=1 // pred_check
      _
    $region15: #{tpu_custom_call.1} parent=1 // pred_check_branch
      %36 = sbr.rel (0) target = $region17
    $region16: #{tpu_custom_call.1} parent=1 // pred_region
      %37 = dma.done [#allocation4], 128
    $region17: #{tpu_custom_call.1} parent=1 // pred_fallthru
      _
    %38 = vsyncpa [#allocation3], 1
    %39 = vsyncpa [#allocation4], 1

// kernel: tpu_custom_call.1
$region0: #{tpu_custom_call.1}
  #allocation0 [shape = 'u32[]', space=smem, size = 0x4, offset = 0x4, fixed_abs, tag = 'smem constant byte address 0x4 - core index']
  #allocation1 [shape = 'u32[144,128]{1,0:T(1,128)}', space=vmem, size = 0x12000, scoped, tag = 'internal scratch']
  %s0 = inlined_call_operand.hbm [shape: f32[2,8,32], index: 0, kind: input, shape index: {}]
  %s1 = inlined_call_operand.hbm [shape: bf16[32,128], index: 1, kind: input, shape index: {}]
  %s2 = inlined_call_operand.vmem [shape: f32[1,128], index: 2, kind: input, shape index: {}]
  %s3 = inlined_call_operand.vmem [shape: f32[8,128], index: 3, kind: input, shape index: {}]
  %s4 = inlined_call_operand.hbm [shape: f32[8,128], index: 4, kind: input, shape index: {}]
  %s5 = inlined_call_operand.hbm [shape: f32[2,8,128], index: 5, kind: output, shape index: {}]
  %s6 = sld [smem:[#allocation0]]
  $region65: #{tpu_custom_call.1} parent=0
    _
  %s8 = ssub.s32 1, %s6
  %s9 = scalar_select 0, %s8, %s6
  $region1: #{tpu_custom_call.1} parent=0
    #allocation2 [shape = 'u8[8192]{0}', space=vmem, size = 0x2000, scoped, tag = 'input window, operand 0']
    #allocation3 [shape = 's32[2]{0}', space=sflag, size = 0x8, scoped, tag = 'scoped memory for tpu_custom_call.1']
    #allocation4 [shape = 's32[2]{0}', space=sflag, size = 0x8, scoped, tag = 'scoped memory for tpu_custom_call.1']
    #allocation5 [shape = 'u8[8192]{0}', space=vmem, size = 0x2000, scoped, tag = 'input window, operand 1, single buffered']
    #allocation6 [shape = 's32[1]{0}', space=sflag, size = 0x4, scoped, tag = 'scoped memory for tpu_custom_call.1']
    #allocation7 [shape = 'u8[4096]{0}', space=vmem, size = 0x1000, scoped, tag = 'input window, operand 4, single buffered']
    #allocation8 [shape = 'u8[8192]{0}', space=vmem, size = 0x2000, scoped, tag = 'output window, operand 0']
    %10 = vsyncpa [#allocation3], 0
    %s11 = scalar_lea.sflag [#allocation3], 1
    %12 = vsyncpa %s11, 0
    %13 = vsyncpa [#allocation6], 0
    %14 = vsyncpa [#allocation4], 0
    %s15 = scalar_lea.sflag [#allocation4], 1
    %16 = vsyncpa %s15, 0
    loop: start=0, step=1, limit=4
    $region2: #{tpu_custom_call.1} parent=1 // loop_pre_header
      _
    $region3: #{tpu_custom_call.1} parent=1 // loop_header
      %s18 = sphi 0, %s22
      %p19 = scmp.ge.s32.totalorder %s18, 4
      %s25 = sphi 0, %s44
      %s26 = sphi 0, %s40
      %s27 = sphi 0, %s36
      %s28 = sphi 0, %s25
      %s29 = sphi 0, %s26
      %s30 = sphi 0, %s27
      %s31 = sphi 0, %s28
      %s32 = sphi 0, %s29
      %s33 = sphi 0, %s30
      %s49 = sphi 0, %s51
      %s52 = sphi 0, %s49
      %s53 = sphi 0, %s52
      %s69 = sphi 0, %s53
      %s75 = sphi 0, %s77
      %s78 = sphi 0, %s75
      %s79 = sphi 0, %s78
      %s95 = sphi 0, %s79
      %s101 = sphi 0, %s103
      %s104 = sphi 0, %s101
      %s105 = sphi 0, %s104
      %s121 = sphi 0, %s105
      %s127 = sphi 0, %s129
      %s130 = sphi 0, %s127
      %s131 = sphi 0, %s130
      %s147 = sphi 0, %s131
      %s153 = sphi 0, %s155
      %s156 = sphi 0, %s153
      %s157 = sphi 0, %s156
      %s173 = sphi 0, %s157
      %s183 = sphi 0, %s185
      %s186 = sphi 0, %s183
      %s187 = sphi 0, %s186
      %s203 = sphi 0, %s187
    $region4: #{tpu_custom_call.1} parent=1 // loop_header_branch
      %21 = sbr.rel (%p19) target = $region8
    $region5: #{tpu_custom_call.1} parent=1 // loop_body
      %s23 = ssub.s32 %s18, 1
      %s24 = ssub.s32 %s18, 2
      %s34 = sadd.s32 1, %s27
      %p35 = scmp.ge.s32.totalorder %s34, 1
      %s36 = scalar_select %p35, 0, %s34
      %s37 = sadd.s32 1, %s26
      %s38 = scalar_select %p35, %s37, %s26
      %p39 = scmp.ge.s32.totalorder %s38, 2
      %s40 = scalar_select %p39, 0, %s38
      %s41 = sadd.s32 1, %s25
      %s42 = scalar_select %p39, %s41, %s25
      %p43 = scmp.ge.s32.totalorder %s42, 1
      %s44 = scalar_select %p43, 0, %s42
      %s45 = ssub.s32 %s26, %s40
      %s46 = ssub.s32 %s25, %s44
      %s47 = sor.u32 %s45, %s46
      %p48 = scmp.eq.s32.totalorder %s47, 0
      %s50 = sadd.s32 %s49, 1
      %s51 = scalar_select %p48, %s49, %s50
      %p54 = pneg %p48
      %p55 = scmp.eq.s32.totalorder %s18, 1
      %p56 = por %p54, %p55
      %p57 = scmp.ne.s32.totalorder %s49, %s52
      %p58 = scmp.eq.s32.totalorder %s18, 0
      %p59 = por %p57, %p58
      %p60 = scmp.ne.s32.totalorder %s49, %s52
      %p61 = scmp.eq.s32.totalorder %s23, 1
      %p62 = por %p60, %p61
      %p63 = scmp.ne.s32.totalorder %s52, %s53
      %p64 = scmp.eq.s32.totalorder %s23, 0
      %p65 = por %p63, %p64
      %p66 = scmp.ne.s32.totalorder %s52, %s53
      %p67 = scmp.eq.s32.totalorder %s24, 1
      %p68 = por %p66, %p67
      %p70 = scmp.ne.s32.totalorder %s53, %s69
      %p71 = scmp.eq.s32.totalorder %s24, 0
      %p72 = por %p70, %p71
      %s73 = ssub.s32 %s27, %s36
      %p74 = scmp.eq.s32.totalorder %s73, 0
      %s76 = sadd.s32 %s75, 1
      %s77 = scalar_select %p74, %s75, %s76
      %p80 = pneg %p74
      %p81 = scmp.eq.s32.totalorder %s18, 1
      %p82 = por %p80, %p81
      %p83 = scmp.ne.s32.totalorder %s75, %s78
      %p84 = scmp.eq.s32.totalorder %s18, 0
      %p85 = por %p83, %p84
      %p86 = scmp.ne.s32.totalorder %s75, %s78
      %p87 = scmp.eq.s32.totalorder %s23, 1
      %p88 = por %p86, %p87
      %p89 = scmp.ne.s32.totalorder %s78, %s79
      %p90 = scmp.eq.s32.totalorder %s23, 0
      %p91 = por %p89, %p90
      %p92 = scmp.ne.s32.totalorder %s78, %s79
      %p93 = scmp.eq.s32.totalorder %s24, 1
      %p94 = por %p92, %p93
      %p96 = scmp.ne.s32.totalorder %s79, %s95
      %p97 = scmp.eq.s32.totalorder %s24, 0
      %p98 = por %p96, %p97
      %s99 = ssub.s32 %s27, %s36
      %p100 = scmp.eq.s32.totalorder %s99, 0
      %s102 = sadd.s32 %s101, 1
      %s103 = scalar_select %p100, %s101, %s102
      %p106 = pneg %p100
      %p107 = scmp.eq.s32.totalorder %s18, 1
      %p108 = por %p106, %p107
      %p109 = scmp.ne.s32.totalorder %s101, %s104
      %p110 = scmp.eq.s32.totalorder %s18, 0
      %p111 = por %p109, %p110
      %p112 = scmp.ne.s32.totalorder %s101, %s104
      %p113 = scmp.eq.s32.totalorder %s23, 1
      %p114 = por %p112, %p113
      %p115 = scmp.ne.s32.totalorder %s104, %s105
      %p116 = scmp.eq.s32.totalorder %s23, 0
      %p117 = por %p115, %p116
      %p118 = scmp.ne.s32.totalorder %s104, %s105
      %p119 = scmp.eq.s32.totalorder %s24, 1
      %p120 = por %p118, %p119
      %p122 = scmp.ne.s32.totalorder %s105, %s121
      %p123 = scmp.eq.s32.totalorder %s24, 0
      %p124 = por %p122, %p123
      %s125 = ssub.s32 %s25, %s44
      %p126 = scmp.eq.s32.totalorder %s125, 0
      %s128 = sadd.s32 %s127, 1
      %s129 = scalar_select %p126, %s127, %s128
      %p132 = pneg %p126
      %p133 = scmp.eq.s32.totalorder %s18, 1
      %p134 = por %p132, %p133
      %p135 = scmp.ne.s32.totalorder %s127, %s130
      %p136 = scmp.eq.s32.totalorder %s18, 0
      %p137 = por %p135, %p136
      %p138 = scmp.ne.s32.totalorder %s127, %s130
      %p139 = scmp.eq.s32.totalorder %s23, 1
      %p140 = por %p138, %p139
      %p141 = scmp.ne.s32.totalorder %s130, %s131
      %p142 = scmp.eq.s32.totalorder %s23, 0
      %p143 = por %p141, %p142
      %p144 = scmp.ne.s32.totalorder %s130, %s131
      %p145 = scmp.eq.s32.totalorder %s24, 1
      %p146 = por %p144, %p145
      %p148 = scmp.ne.s32.totalorder %s131, %s147
      %p149 = scmp.eq.s32.totalorder %s24, 0
      %p150 = por %p148, %p149
      %s151 = ssub.s32 %s25, %s44
      %p152 = scmp.eq.s32.totalorder %s151, 0
      %s154 = sadd.s32 %s153, 1
      %s155 = scalar_select %p152, %s153, %s154
      %p158 = pneg %p152
      %p159 = scmp.eq.s32.totalorder %s18, 1
      %p160 = por %p158, %p159
      %p161 = scmp.ne.s32.totalorder %s153, %s156
      %p162 = scmp.eq.s32.totalorder %s18, 0
      %p163 = por %p161, %p162
      %p164 = scmp.ne.s32.totalorder %s153, %s156
      %p165 = scmp.eq.s32.totalorder %s23, 1
      %p166 = por %p164, %p165
      %p167 = scmp.ne.s32.totalorder %s156, %s157
      %p168 = scmp.eq.s32.totalorder %s23, 0
      %p169 = por %p167, %p168
      %p170 = scmp.ne.s32.totalorder %s156, %s157
      %p171 = scmp.eq.s32.totalorder %s24, 1
      %p172 = por %p170, %p171
      %p174 = scmp.ne.s32.totalorder %s157, %s173
      %p175 = scmp.eq.s32.totalorder %s24, 0
      %p176 = por %p174, %p175
      %s177 = ssub.s32 %s26, %s40
      %s178 = ssub.s32 %s25, %s44
      %s179 = sor.u32 %s177, %s178
      %s180 = ssub.s32 %s27, %s36
      %s181 = sor.u32 %s179, %s180
      %p182 = scmp.eq.s32.totalorder %s181, 0
      %s184 = sadd.s32 %s183, 1
      %s185 = scalar_select %p182, %s183, %s184
      %p188 = pneg %p182
      %p189 = scmp.eq.s32.totalorder %s18, 1
      %p190 = por %p188, %p189
      %p191 = scmp.ne.s32.totalorder %s183, %s186
      %p192 = scmp.eq.s32.totalorder %s18, 0
      %p193 = por %p191, %p192
      %p194 = scmp.ne.s32.totalorder %s183, %s186
      %p195 = scmp.eq.s32.totalorder %s23, 1
      %p196 = por %p194, %p195
      %p197 = scmp.ne.s32.totalorder %s186, %s187
      %p198 = scmp.eq.s32.totalorder %s23, 0
      %p199 = por %p197, %p198
      %p200 = scmp.ne.s32.totalorder %s186, %s187
      %p201 = scmp.eq.s32.totalorder %s24, 1
      %p202 = por %p200, %p201
      %p204 = scmp.ne.s32.totalorder %s187, %s203
      %p205 = scmp.eq.s32.totalorder %s24, 0
      %p206 = por %p204, %p205
      %p207 = scmp.le.s32.totalorder 1, %s18
      %p208 = scmp.lt.s32.totalorder %s18, 3
      %p209 = pnand %p207, %p208
      %p210 = pneg %p209
      // Predicated region
      $region9: #{tpu_custom_call.1} parent=5 // pred_check
        _
      $region10: #{tpu_custom_call.1} parent=5 // pred_check_branch
        %212 = sbr.rel (%p209) target = $region12
      $region11: #{tpu_custom_call.1} parent=5 // pred_region
        %s213 = ssub.s32 %s18, 1
        // Predicated region
        $region13: #{tpu_custom_call.1} parent=11 // pred_check
          %p214 = pneg %p91
        $region14: #{tpu_custom_call.1} parent=11 // pred_check_branch
          %216 = sbr.rel (%p214) target = $region16
        $region15: #{tpu_custom_call.1} parent=11 // pred_region
          %s218 = ssub.s32 256, 256
          %219 = vsyncadd [#allocation6], %s218
          %s220 = smul.addr %s30, 64
          %s221 = scalar_lea.hbm %s1, %s220
          %s222 = sshll.u32 [#allocation5], 4
          %s223 = int_to_ptr.vmem [resolvable:$true] %s222
          %228 = dma.hbm_to_vmem [thread:$0]  %s221, 256, %s223, [#allocation6], 64, 64, 4
        $region16: #{tpu_custom_call.1} parent=11 // pred_fallthru
          _
        // Predicated region
        $region17: #{tpu_custom_call.1} parent=11 // pred_check
          %p229 = pneg %p117
        $region18: #{tpu_custom_call.1} parent=11 // pred_check_branch
          %231 = sbr.rel (%p229) target = $region20
        $region19: #{tpu_custom_call.1} parent=11 // pred_region
          %p232 = scmp.lt.s32.totalorder %s30, 0
          %s233 = scalar_select %p232, %s30, 0
          %s234 = scalar_lea.vmem %s2, %s233
        $region20: #{tpu_custom_call.1} parent=11 // pred_fallthru
          _
        // Predicated region
        $region21: #{tpu_custom_call.1} parent=11 // pred_check
          %p235 = pneg %p143
        $region22: #{tpu_custom_call.1} parent=11 // pred_check_branch
          %237 = sbr.rel (%p235) target = $region24
        $region23: #{tpu_custom_call.1} parent=11 // pred_region
          %p238 = scmp.lt.s32.totalorder %s28, 0
          %s239 = scalar_select %p238, %s28, 0
          %s240 = smul.addr %s239, 8
          %s241 = scalar_lea.vmem %s3, %s240
        $region24: #{tpu_custom_call.1} parent=11 // pred_fallthru
          _
        // Predicated region
        $region25: #{tpu_custom_call.1} parent=11 // pred_check
          %p242 = pneg %p169
        $region26: #{tpu_custom_call.1} parent=11 // pred_check_branch
          %244 = sbr.rel (%p242) target = $region28
        $region27: #{tpu_custom_call.1} parent=11 // pred_region
          %s246 = ssub.s32 128, 128
          %247 = vsyncadd [#allocation6], %s246
          %s248 = smul.addr %s28, 128
          %s249 = scalar_lea.hbm %s4, %s248
          %s251 = sshll.u32 [#allocation7], 4
          %s252 = int_to_ptr.vmem [resolvable:$true] %s251
          %254 = dma.hbm_to_vmem [thread:$0]  %s249, 128, %s252, [#allocation6]
        $region28: #{tpu_custom_call.1} parent=11 // pred_fallthru
          _
      $region12: #{tpu_custom_call.1} parent=5 // pred_fallthru
        _
      %p255 = scmp.lt.s32.totalorder %s18, 2
      // Predicated region
      $region29: #{tpu_custom_call.1} parent=5 // pred_check
        %p256 = pneg %p255
      $region30: #{tpu_custom_call.1} parent=5 // pred_check_branch
        %258 = sbr.rel (%p256) target = $region32
      $region31: #{tpu_custom_call.1} parent=5 // pred_region
        // Predicated region
        $region33: #{tpu_custom_call.1} parent=31 // pred_check
          %p259 = pneg %p59
        $region34: #{tpu_custom_call.1} parent=31 // pred_check_branch
          %261 = sbr.rel (%p259) target = $region36
        $region35: #{tpu_custom_call.1} parent=31 // pred_region
          %s262 = sand.u32 %s49, 1
          %s263 = scalar_lea.sflag [#allocation3], %s262
          %s264 = sand.u32 %s49, 1
          %s265 = smul.addr %s264, 8
          %s266 = scalar_lea.vmem [#allocation2], %s265
          %s268 = ssub.s32 128, 128
          %269 = vsyncadd %s263, %s268
          %s270 = sadd.s32 %s25, %s26
          %s271 = smul.addr %s270, 128
          %s272 = scalar_lea.hbm %s0, %s271
          %s274 = sshll.u32 %s266, 4
          %s275 = int_to_ptr.vmem [resolvable:$true] %s274
          %277 = dma.hbm_to_vmem [thread:$0]  %s272, 128, %s275, %s263
        $region36: #{tpu_custom_call.1} parent=31 // pred_fallthru
          _
      $region32: #{tpu_custom_call.1} parent=5 // pred_fallthru
        _
      %p278 = scmp.le.s32.totalorder 1, %s18
      %p279 = scmp.lt.s32.totalorder %s18, 3
      %p280 = pnand %p278, %p279
      %p281 = pneg %p280
      // Predicated region
      $region37: #{tpu_custom_call.1} parent=5 // pred_check
        _
      $region38: #{tpu_custom_call.1} parent=5 // pred_check_branch
        %283 = sbr.rel (%p280) target = $region40
      $region39: #{tpu_custom_call.1} parent=5 // pred_region
        %s284 = ssub.s32 %s18, 1
        %s285 = sand.u32 %s52, 1
        %s286 = scalar_lea.sflag [#allocation3], %s285
        %s287 = sand.u32 %s52, 1
        %s288 = smul.addr %s287, 8
        %s289 = scalar_lea.vmem [#allocation2], %s288
        // Predicated region
        $region41: #{tpu_custom_call.1} parent=39 // pred_check
          %p290 = pneg %p65
        $region42: #{tpu_custom_call.1} parent=39 // pred_check_branch
          %292 = sbr.rel (%p290) target = $region44
        $region43: #{tpu_custom_call.1} parent=39 // pred_region
          %293 = dma.done %s286, 128
        $region44: #{tpu_custom_call.1} parent=39 // pred_fallthru
          _
        // Predicated region
        $region45: #{tpu_custom_call.1} parent=39 // pred_check
          %p294 = pneg %p91
        $region46: #{tpu_custom_call.1} parent=39 // pred_check_branch
          %296 = sbr.rel (%p294) target = $region48
        $region47: #{tpu_custom_call.1} parent=39 // pred_region
          %297 = dma.done [#allocation6], 256
        $region48: #{tpu_custom_call.1} parent=39 // pred_fallthru
          _
        // Predicated region
        $region49: #{tpu_custom_call.1} parent=39 // pred_check
          %p298 = pneg %p169
        $region50: #{tpu_custom_call.1} parent=39 // pred_check_branch
          %300 = sbr.rel (%p298) target = $region52
        $region51: #{tpu_custom_call.1} parent=39 // pred_region
          %301 = dma.done [#allocation6], 128
        $region52: #{tpu_custom_call.1} parent=39 // pred_fallthru
          _
        %s302 = sand.u32 %s52, 1
        %s303 = scalar_lea.sflag [#allocation3], %s302
        %s304 = sand.u32 %s52, 1
        %s305 = smul.addr %s304, 8
        %s306 = scalar_lea.vmem [#allocation2], %s305
        %p307 = pneg %p65
        %p308 = pneg %p62
        %p309 = pneg %p91
        %p310 = pneg %p88
        %p311 = scmp.lt.s32.totalorder %s30, 0
        %s312 = scalar_select %p311, %s30, 0
        %s313 = scalar_lea.vmem %s2, %s312
        %p314 = pneg %p117
        %p315 = pneg %p114
        %p316 = scmp.lt.s32.totalorder %s28, 0
        %s317 = scalar_select %p316, %s28, 0
        %s318 = smul.addr %s317, 8
        %s319 = scalar_lea.vmem %s3, %s318
        %p320 = pneg %p143
        %p321 = pneg %p140
        %p322 = pneg %p169
        %p323 = pneg %p166
        %p324 = pneg %p199
        %p325 = pneg %p196
        %s326 = sand.u32 %s186, 1
        %s327 = scalar_lea.sflag [#allocation4], %s326
        %s328 = sand.u32 %s186, 1
        %s329 = smul.addr %s328, 8
        %s330 = scalar_lea.vmem [#allocation8], %s329
        %p331 = scmp.lt.s32.totalorder %s30, 0
        %s332 = scalar_select %p331, %s30, 0
        %s333 = scalar_lea.vmem %s2, %s332
        %p334 = scmp.lt.s32.totalorder %s28, 0
        %s335 = scalar_select %p334, %s28, 0
        %s336 = smul.addr %s335, 8
        %s337 = scalar_lea.vmem %s3, %s336
        %v339 = vld [vmem:[%s289] sm:$0xff]
        %v340 = vpack.c.bf16 %v339, %v339
        %v341 = vld [vmem:[#allocation5] sm:$0xf]
        %v342 = vld [vmem:[#allocation5 + $0x4] sm:$0xf]
        %v343 = vld [vmem:[#allocation5 + $0x8] sm:$0xf]
        %v344 = vld [vmem:[#allocation5 + $0xc] sm:$0xf]
        %v345 = vld [vmem:[%s333] sm:$0x1]
        %v347 = vlaneseq
        %v348 = vshrl.u32 %v347, 7
        %v349 = vsub.s32 0, %v348
        %v350 = vrot.slane %v345, %v349
        %v356 = vunpack.c.l.b16 %v341
        %v357 = vunpack.c.l.b16 %v342
        %v358 = vunpack.c.l.b16 %v343
        %v359 = vunpack.c.l.b16 %v344
        %v360 = vpack.c.b16 %v357, %v356
        %v361 = vpack.c.b16 %v359, %v358
        %vm364 = vcmask 261120
        %v366 = vsel %vm364, %v340, 0
        %368 = vmatprep.subr.bf16.mxu0 0
        %369 = vmatpush1.bf16.msra.mxu0 %v360
        %370 = vmatprep.subr.bf16.mxu0 0
        %371 = vmatpush1.bf16.msra.mxu0 %v361
        %372 = vmatprep.subr.bf16.mxu0 0
        %373 = vmatpush1.bf16.msra.mxu0 0
        %374 = vmatprep.subr.bf16.mxu0 0
        %375 = vmatpush1.bf16.msra.mxu0 0
        %376 = vmatprep.subr.bf16.mxu0 0
        %377 = vmatpush1.bf16.msra.mxu0 0
        %378 = vmatprep.subr.bf16.mxu0 0
        %379 = vmatpush1.bf16.msra.mxu0 0
        %380 = vmatprep.subr.bf16.mxu0 0
        %381 = vmatpush1.bf16.msra.mxu0 0
        %382 = vmatprep.subr.bf16.mxu0 0
        %383 = vmatpush1.bf16.msra.mxu0 0
        %384 = vmatprep.subr.bf16.mxu0 0
        %385 = vmatpush1.bf16.msra.mxu0 0
        %386 = vmatprep.subr.bf16.mxu0 0
        %387 = vmatpush1.bf16.msra.mxu0 0
        %388 = vmatprep.subr.bf16.mxu0 0
        %389 = vmatpush1.bf16.msra.mxu0 0
        %390 = vmatprep.subr.bf16.mxu0 0
        %391 = vmatpush1.bf16.msra.mxu0 0
        %392 = vmatprep.subr.bf16.mxu0 0
        %393 = vmatpush1.bf16.msra.mxu0 0
        %394 = vmatprep.subr.bf16.mxu0 0
        %395 = vmatpush1.bf16.msra.mxu0 0
        %396 = vmatprep.subr.bf16.mxu0 0
        %397 = vmatpush1.bf16.msra.mxu0 0
        %398 = vmatprep.subr.bf16.mxu0 0
        %399 = vmatpush1.bf16.msra.mxu0 0
        %400 = vmatprep.mubr.bf16.mxu0 0
        %401 = vmatmul.mubr.bf16.gmra.mrb[0].mxu0 %v366
        %v402 = vpop.f32.mrb[0].mxu0
        %v403 = vadd.f32 %v350, %v402
        %v404 = vpop.f32.mrb[0].mxu0
        %v405 = vpop.f32.mrb[0].mxu0
        %v406 = vpop.f32.mrb[0].mxu0
        %407 = vdwg.mxu0
        %v408 = vld [vmem:[%s337] sm:$0xff]
        %v409 = vld [vmem:[#allocation7] sm:$0xff]
        %410 = vrot.lane.b32.xlu0 %v403, 4
        %v411 = vpop.permute.xlu0 %410
        %412 = vrot.lane.b32.xlu0 %v403, 124
        %v413 = vpop.permute.xlu0 %412
        %v414 = vlaneseq
        %v415 = vand.u32 %v414, 127
        %vm416 = vcmp.lt.s32.totalorder %v415, 0
        %v417 = vsub.s32 0, %v415
        %v418 = vsel %vm416, %v417, %v415
        %v419 = vshrl.u32 %v418, 3
        %v420 = vand.u32 %v418, 7
        %v421 = vsub.s32 0, %v420
        %v422 = vsel %vm416, %v421, %v420
        %vm423 = vcmp.ne.s32.totalorder %v422, 0
        %vm424 = vcmp.lt.s32.totalorder %v422, 0
        %vm425 = vmand %vm424, %vm423
        %v426 = vadd.s32 %v422, 8
        %v427 = vsel %vm425, %v426, %v422
        %vm428 = vcmp.ge.s32.totalorder %v427, 4
        %v429 = vsel %vm428, %v411, %v413
        %v430 = vmul.f32 %v403, %v408
        %v431 = vmul.f32 %v429, %v409
        %v432 = vadd.f32 %v430, %v431
        %433 = vst [vmem:[%s330] sm:$0xff] %v432
        %s434 = sand.u32 %s186, 1
        %s435 = scalar_lea.sflag [#allocation4], %s434
        %s436 = sand.u32 %s186, 1
        %s437 = smul.addr %s436, 8
        %s438 = scalar_lea.vmem [#allocation8], %s437
        // Predicated region
        $region53: #{tpu_custom_call.1} parent=39 // pred_check
          %p439 = pneg %p196
        $region54: #{tpu_custom_call.1} parent=39 // pred_check_branch
          %441 = sbr.rel (%p439) target = $region56
        $region55: #{tpu_custom_call.1} parent=39 // pred_region
          %s443 = ssub.s32 128, 128
          %444 = vsyncadd %s435, %s443
          %s445 = sadd.s32 %s30, %s28
          %s446 = sadd.s32 %s445, %s29
          %s447 = smul.addr %s446, 128
          %s448 = scalar_lea.hbm %s5, %s447
          %s450 = sshll.u32 %s438, 4
          %s451 = int_to_ptr.vmem [resolvable:$true] %s450
          %453 = dma.vmem_to_hbm [thread:$0]  %s451, 128, %s448, %s435
        $region56: #{tpu_custom_call.1} parent=39 // pred_fallthru
          _
      $region40: #{tpu_custom_call.1} parent=5 // pred_fallthru
        _
      %p454 = scmp.le.s32.totalorder 2, %s18
      // Predicated region
      $region57: #{tpu_custom_call.1} parent=5 // pred_check
        %p455 = pneg %p454
      $region58: #{tpu_custom_call.1} parent=5 // pred_check_branch
        %457 = sbr.rel (%p455) target = $region60
      $region59: #{tpu_custom_call.1} parent=5 // pred_region
        %s458 = ssub.s32 %s18, 2
        // Predicated region
        $region61: #{tpu_custom_call.1} parent=59 // pred_check
          %p459 = pneg %p202
        $region62: #{tpu_custom_call.1} parent=59 // pred_check_branch
          %461 = sbr.rel (%p459) target = $region64
        $region63: #{tpu_custom_call.1} parent=59 // pred_region
          %s462 = sand.u32 %s187, 1
          %s463 = scalar_lea.sflag [#allocation4], %s462
          %s464 = sand.u32 %s187, 1
          %s465 = smul.addr %s464, 8
          %s466 = scalar_lea.vmem [#allocation8], %s465
          %467 = dma.done %s463, 128
        $region64: #{tpu_custom_call.1} parent=59 // pred_fallthru
          _
      $region60: #{tpu_custom_call.1} parent=5 // pred_fallthru
        _
    $region6: #{tpu_custom_call.1} parent=1 // loop_footer
      %s22 = sadd.s32 1, %s18
    $region7: #{tpu_custom_call.1} parent=1 // loop_footer_branch
      %17 = sbr.rel target = $region3
    $region8: #{tpu_custom_call.1} parent=1 // loop_exit
      _
    %468 = vsyncpa [#allocation3], 1
    %s469 = scalar_lea.sflag [#allocation3], 1
    %470 = vsyncpa %s469, 1
    %471 = vsyncpa [#allocation6], 1
    %472 = vsyncpa [#allocation4], 1
    %s473 = scalar_lea.sflag [#allocation4], 1
    %474 = vsyncpa %s473, 1

// kernel: tpu_custom_call.1
$region0: #{tpu_custom_call.1}
  #allocation0 [shape = 'u32[]', space=smem, size = 0x4, offset = 0x4, fixed_abs, tag = 'smem constant byte address 0x4 - core index']
  #allocation1 [shape = 'u32[144,128]{1,0:T(1,128)}', space=vmem, size = 0x12000, scoped, tag = 'internal scratch']
  %s0 = inlined_call_operand.hbm [shape: f32[2,8,32], index: 0, kind: input, shape index: {}]
  %s1 = inlined_call_operand.hbm [shape: bf16[32,128], index: 1, kind: input, shape index: {}]
  %s2 = inlined_call_operand.vmem [shape: f32[1,128], index: 2, kind: input, shape index: {}]
  %s3 = inlined_call_operand.vmem [shape: f32[8,128], index: 3, kind: input, shape index: {}]
  %s4 = inlined_call_operand.hbm [shape: f32[8,128], index: 4, kind: input, shape index: {}]
  %s5 = inlined_call_operand.hbm [shape: f32[2,8,128], index: 5, kind: output, shape index: {}]
  %s6 = sld [smem:[#allocation0]]
  $region65: #{tpu_custom_call.1} parent=0
    _
  %s8 = ssub.s32 1, %s6
  %s9 = scalar_select 0, %s8, %s6
  $region1: #{tpu_custom_call.1} parent=0
    #allocation2 [shape = 'u8[8192]{0}', space=vmem, size = 0x2000, scoped, tag = 'input window, operand 0']
    #allocation3 [shape = 's32[2]{0}', space=sflag, size = 0x8, scoped, tag = 'scoped memory for tpu_custom_call.1']
    #allocation4 [shape = 's32[2]{0}', space=sflag, size = 0x8, scoped, tag = 'scoped memory for tpu_custom_call.1']
    #allocation5 [shape = 'u8[8192]{0}', space=vmem, size = 0x2000, scoped, tag = 'input window, operand 1, single buffered']
    #allocation6 [shape = 's32[1]{0}', space=sflag, size = 0x4, scoped, tag = 'scoped memory for tpu_custom_call.1']
    #allocation7 [shape = 'u8[4096]{0}', space=vmem, size = 0x1000, scoped, tag = 'input window, operand 4, single buffered']
    #allocation8 [shape = 'u8[8192]{0}', space=vmem, size = 0x2000, scoped, tag = 'output window, operand 0']
    %10 = vsyncpa [#allocation3], 0
    %s11 = scalar_lea.sflag [#allocation3], 1
    %12 = vsyncpa %s11, 0
    %13 = vsyncpa [#allocation6], 0
    %14 = vsyncpa [#allocation4], 0
    %s15 = scalar_lea.sflag [#allocation4], 1
    %16 = vsyncpa %s15, 0
    loop: start=0, step=1, limit=4
    $region2: #{tpu_custom_call.1} parent=1 // loop_pre_header
      _
    $region3: #{tpu_custom_call.1} parent=1 // loop_header
      %s18 = sphi 0, %s22
      %p19 = scmp.ge.s32.totalorder %s18, 4
      %s25 = sphi 0, %s44
      %s26 = sphi 0, %s40
      %s27 = sphi 0, %s36
      %s28 = sphi 0, %s25
      %s29 = sphi 0, %s26
      %s30 = sphi 0, %s27
      %s31 = sphi 0, %s28
      %s32 = sphi 0, %s29
      %s33 = sphi 0, %s30
      %s49 = sphi 0, %s51
      %s52 = sphi 0, %s49
      %s53 = sphi 0, %s52
      %s69 = sphi 0, %s53
      %s75 = sphi 0, %s77
      %s78 = sphi 0, %s75
      %s79 = sphi 0, %s78
      %s95 = sphi 0, %s79
      %s101 = sphi 0, %s103
      %s104 = sphi 0, %s101
      %s105 = sphi 0, %s104
      %s121 = sphi 0, %s105
      %s127 = sphi 0, %s129
      %s130 = sphi 0, %s127
      %s131 = sphi 0, %s130
      %s147 = sphi 0, %s131
      %s153 = sphi 0, %s155
      %s156 = sphi 0, %s153
      %s157 = sphi 0, %s156
      %s173 = sphi 0, %s157
      %s183 = sphi 0, %s185
      %s186 = sphi 0, %s183
      %s187 = sphi 0, %s186
      %s203 = sphi 0, %s187
    $region4: #{tpu_custom_call.1} parent=1 // loop_header_branch
      %21 = sbr.rel (%p19) target = $region8
    $region5: #{tpu_custom_call.1} parent=1 // loop_body
      %s23 = ssub.s32 %s18, 1
      %s24 = ssub.s32 %s18, 2
      %s34 = sadd.s32 1, %s27
      %p35 = scmp.ge.s32.totalorder %s34, 1
      %s36 = scalar_select %p35, 0, %s34
      %s37 = sadd.s32 1, %s26
      %s38 = scalar_select %p35, %s37, %s26
      %p39 = scmp.ge.s32.totalorder %s38, 2
      %s40 = scalar_select %p39, 0, %s38
      %s41 = sadd.s32 1, %s25
      %s42 = scalar_select %p39, %s41, %s25
      %p43 = scmp.ge.s32.totalorder %s42, 1
      %s44 = scalar_select %p43, 0, %s42
      %s45 = ssub.s32 %s26, %s40
      %s46 = ssub.s32 %s25, %s44
      %s47 = sor.u32 %s45, %s46
      %p48 = scmp.eq.s32.totalorder %s47, 0
      %s50 = sadd.s32 %s49, 1
      %s51 = scalar_select %p48, %s49, %s50
      %p54 = pneg %p48
      %p55 = scmp.eq.s32.totalorder %s18, 1
      %p56 = por %p54, %p55
      %p57 = scmp.ne.s32.totalorder %s49, %s52
      %p58 = scmp.eq.s32.totalorder %s18, 0
      %p59 = por %p57, %p58
      %p60 = scmp.ne.s32.totalorder %s49, %s52
      %p61 = scmp.eq.s32.totalorder %s23, 1
      %p62 = por %p60, %p61
      %p63 = scmp.ne.s32.totalorder %s52, %s53
      %p64 = scmp.eq.s32.totalorder %s23, 0
      %p65 = por %p63, %p64
      %p66 = scmp.ne.s32.totalorder %s52, %s53
      %p67 = scmp.eq.s32.totalorder %s24, 1
      %p68 = por %p66, %p67
      %p70 = scmp.ne.s32.totalorder %s53, %s69
      %p71 = scmp.eq.s32.totalorder %s24, 0
      %p72 = por %p70, %p71
      %s73 = ssub.s32 %s27, %s36
      %p74 = scmp.eq.s32.totalorder %s73, 0
      %s76 = sadd.s32 %s75, 1
      %s77 = scalar_select %p74, %s75, %s76
      %p80 = pneg %p74
      %p81 = scmp.eq.s32.totalorder %s18, 1
      %p82 = por %p80, %p81
      %p83 = scmp.ne.s32.totalorder %s75, %s78
      %p84 = scmp.eq.s32.totalorder %s18, 0
      %p85 = por %p83, %p84
      %p86 = scmp.ne.s32.totalorder %s75, %s78
      %p87 = scmp.eq.s32.totalorder %s23, 1
      %p88 = por %p86, %p87
      %p89 = scmp.ne.s32.totalorder %s78, %s79
      %p90 = scmp.eq.s32.totalorder %s23, 0
      %p91 = por %p89, %p90
      %p92 = scmp.ne.s32.totalorder %s78, %s79
      %p93 = scmp.eq.s32.totalorder %s24, 1
      %p94 = por %p92, %p93
      %p96 = scmp.ne.s32.totalorder %s79, %s95
      %p97 = scmp.eq.s32.totalorder %s24, 0
      %p98 = por %p96, %p97
      %s99 = ssub.s32 %s27, %s36
      %p100 = scmp.eq.s32.totalorder %s99, 0
      %s102 = sadd.s32 %s101, 1
      %s103 = scalar_select %p100, %s101, %s102
      %p106 = pneg %p100
      %p107 = scmp.eq.s32.totalorder %s18, 1
      %p108 = por %p106, %p107
      %p109 = scmp.ne.s32.totalorder %s101, %s104
      %p110 = scmp.eq.s32.totalorder %s18, 0
      %p111 = por %p109, %p110
      %p112 = scmp.ne.s32.totalorder %s101, %s104
      %p113 = scmp.eq.s32.totalorder %s23, 1
      %p114 = por %p112, %p113
      %p115 = scmp.ne.s32.totalorder %s104, %s105
      %p116 = scmp.eq.s32.totalorder %s23, 0
      %p117 = por %p115, %p116
      %p118 = scmp.ne.s32.totalorder %s104, %s105
      %p119 = scmp.eq.s32.totalorder %s24, 1
      %p120 = por %p118, %p119
      %p122 = scmp.ne.s32.totalorder %s105, %s121
      %p123 = scmp.eq.s32.totalorder %s24, 0
      %p124 = por %p122, %p123
      %s125 = ssub.s32 %s25, %s44
      %p126 = scmp.eq.s32.totalorder %s125, 0
      %s128 = sadd.s32 %s127, 1
      %s129 = scalar_select %p126, %s127, %s128
      %p132 = pneg %p126
      %p133 = scmp.eq.s32.totalorder %s18, 1
      %p134 = por %p132, %p133
      %p135 = scmp.ne.s32.totalorder %s127, %s130
      %p136 = scmp.eq.s32.totalorder %s18, 0
      %p137 = por %p135, %p136
      %p138 = scmp.ne.s32.totalorder %s127, %s130
      %p139 = scmp.eq.s32.totalorder %s23, 1
      %p140 = por %p138, %p139
      %p141 = scmp.ne.s32.totalorder %s130, %s131
      %p142 = scmp.eq.s32.totalorder %s23, 0
      %p143 = por %p141, %p142
      %p144 = scmp.ne.s32.totalorder %s130, %s131
      %p145 = scmp.eq.s32.totalorder %s24, 1
      %p146 = por %p144, %p145
      %p148 = scmp.ne.s32.totalorder %s131, %s147
      %p149 = scmp.eq.s32.totalorder %s24, 0
      %p150 = por %p148, %p149
      %s151 = ssub.s32 %s25, %s44
      %p152 = scmp.eq.s32.totalorder %s151, 0
      %s154 = sadd.s32 %s153, 1
      %s155 = scalar_select %p152, %s153, %s154
      %p158 = pneg %p152
      %p159 = scmp.eq.s32.totalorder %s18, 1
      %p160 = por %p158, %p159
      %p161 = scmp.ne.s32.totalorder %s153, %s156
      %p162 = scmp.eq.s32.totalorder %s18, 0
      %p163 = por %p161, %p162
      %p164 = scmp.ne.s32.totalorder %s153, %s156
      %p165 = scmp.eq.s32.totalorder %s23, 1
      %p166 = por %p164, %p165
      %p167 = scmp.ne.s32.totalorder %s156, %s157
      %p168 = scmp.eq.s32.totalorder %s23, 0
      %p169 = por %p167, %p168
      %p170 = scmp.ne.s32.totalorder %s156, %s157
      %p171 = scmp.eq.s32.totalorder %s24, 1
      %p172 = por %p170, %p171
      %p174 = scmp.ne.s32.totalorder %s157, %s173
      %p175 = scmp.eq.s32.totalorder %s24, 0
      %p176 = por %p174, %p175
      %s177 = ssub.s32 %s26, %s40
      %s178 = ssub.s32 %s25, %s44
      %s179 = sor.u32 %s177, %s178
      %s180 = ssub.s32 %s27, %s36
      %s181 = sor.u32 %s179, %s180
      %p182 = scmp.eq.s32.totalorder %s181, 0
      %s184 = sadd.s32 %s183, 1
      %s185 = scalar_select %p182, %s183, %s184
      %p188 = pneg %p182
      %p189 = scmp.eq.s32.totalorder %s18, 1
      %p190 = por %p188, %p189
      %p191 = scmp.ne.s32.totalorder %s183, %s186
      %p192 = scmp.eq.s32.totalorder %s18, 0
      %p193 = por %p191, %p192
      %p194 = scmp.ne.s32.totalorder %s183, %s186
      %p195 = scmp.eq.s32.totalorder %s23, 1
      %p196 = por %p194, %p195
      %p197 = scmp.ne.s32.totalorder %s186, %s187
      %p198 = scmp.eq.s32.totalorder %s23, 0
      %p199 = por %p197, %p198
      %p200 = scmp.ne.s32.totalorder %s186, %s187
      %p201 = scmp.eq.s32.totalorder %s24, 1
      %p202 = por %p200, %p201
      %p204 = scmp.ne.s32.totalorder %s187, %s203
      %p205 = scmp.eq.s32.totalorder %s24, 0
      %p206 = por %p204, %p205
      %p207 = scmp.le.s32.totalorder 1, %s18
      %p208 = scmp.lt.s32.totalorder %s18, 3
      %p209 = pnand %p207, %p208
      %p210 = pneg %p209
      // Predicated region
      $region9: #{tpu_custom_call.1} parent=5 // pred_check
        _
      $region10: #{tpu_custom_call.1} parent=5 // pred_check_branch
        %212 = sbr.rel (%p209) target = $region12
      $region11: #{tpu_custom_call.1} parent=5 // pred_region
        %s213 = ssub.s32 %s18, 1
        // Predicated region
        $region13: #{tpu_custom_call.1} parent=11 // pred_check
          %p214 = pneg %p91
        $region14: #{tpu_custom_call.1} parent=11 // pred_check_branch
          %216 = sbr.rel (%p214) target = $region16
        $region15: #{tpu_custom_call.1} parent=11 // pred_region
          %s218 = ssub.s32 256, 256
          %219 = vsyncadd [#allocation6], %s218
          %s220 = smul.addr %s30, 64
          %s221 = scalar_lea.hbm %s1, %s220
          %s222 = sshll.u32 [#allocation5], 4
          %s223 = int_to_ptr.vmem [resolvable:$true] %s222
          %228 = dma.hbm_to_vmem [thread:$0]  %s221, 256, %s223, [#allocation6], 64, 64, 4
        $region16: #{tpu_custom_call.1} parent=11 // pred_fallthru
          _
        // Predicated region
        $region17: #{tpu_custom_call.1} parent=11 // pred_check
          %p229 = pneg %p117
        $region18: #{tpu_custom_call.1} parent=11 // pred_check_branch
          %231 = sbr.rel (%p229) target = $region20
        $region19: #{tpu_custom_call.1} parent=11 // pred_region
          %p232 = scmp.lt.s32.totalorder %s30, 0
          %s233 = scalar_select %p232, %s30, 0
          %s234 = scalar_lea.vmem %s2, %s233
        $region20: #{tpu_custom_call.1} parent=11 // pred_fallthru
          _
        // Predicated region
        $region21: #{tpu_custom_call.1} parent=11 // pred_check
          %p235 = pneg %p143
        $region22: #{tpu_custom_call.1} parent=11 // pred_check_branch
          %237 = sbr.rel (%p235) target = $region24
        $region23: #{tpu_custom_call.1} parent=11 // pred_region
          %p238 = scmp.lt.s32.totalorder %s28, 0
          %s239 = scalar_select %p238, %s28, 0
          %s240 = smul.addr %s239, 8
          %s241 = scalar_lea.vmem %s3, %s240
        $region24: #{tpu_custom_call.1} parent=11 // pred_fallthru
          _
        // Predicated region
        $region25: #{tpu_custom_call.1} parent=11 // pred_check
          %p242 = pneg %p169
        $region26: #{tpu_custom_call.1} parent=11 // pred_check_branch
          %244 = sbr.rel (%p242) target = $region28
        $region27: #{tpu_custom_call.1} parent=11 // pred_region
          %s246 = ssub.s32 128, 128
          %247 = vsyncadd [#allocation6], %s246
          %s248 = smul.addr %s28, 128
          %s249 = scalar_lea.hbm %s4, %s248
          %s251 = sshll.u32 [#allocation7], 4
          %s252 = int_to_ptr.vmem [resolvable:$true] %s251
          %254 = dma.hbm_to_vmem [thread:$0]  %s249, 128, %s252, [#allocation6]
        $region28: #{tpu_custom_call.1} parent=11 // pred_fallthru
          _
      $region12: #{tpu_custom_call.1} parent=5 // pred_fallthru
        _
      %p255 = scmp.lt.s32.totalorder %s18, 2
      // Predicated region
      $region29: #{tpu_custom_call.1} parent=5 // pred_check
        %p256 = pneg %p255
      $region30: #{tpu_custom_call.1} parent=5 // pred_check_branch
        %258 = sbr.rel (%p256) target = $region32
      $region31: #{tpu_custom_call.1} parent=5 // pred_region
        // Predicated region
        $region33: #{tpu_custom_call.1} parent=31 // pred_check
          %p259 = pneg %p59
        $region34: #{tpu_custom_call.1} parent=31 // pred_check_branch
          %261 = sbr.rel (%p259) target = $region36
        $region35: #{tpu_custom_call.1} parent=31 // pred_region
          %s262 = sand.u32 %s49, 1
          %s263 = scalar_lea.sflag [#allocation3], %s262
          %s264 = sand.u32 %s49, 1
          %s265 = smul.addr %s264, 8
          %s266 = scalar_lea.vmem [#allocation2], %s265
          %s268 = ssub.s32 128, 128
          %269 = vsyncadd %s263, %s268
          %s270 = sadd.s32 %s25, %s26
          %s271 = smul.addr %s270, 128
          %s272 = scalar_lea.hbm %s0, %s271
          %s274 = sshll.u32 %s266, 4
          %s275 = int_to_ptr.vmem [resolvable:$true] %s274
          %277 = dma.hbm_to_vmem [thread:$0]  %s272, 128, %s275, %s263
        $region36: #{tpu_custom_call.1} parent=31 // pred_fallthru
          _
      $region32: #{tpu_custom_call.1} parent=5 // pred_fallthru
        _
      %p278 = scmp.le.s32.totalorder 1, %s18
      %p279 = scmp.lt.s32.totalorder %s18, 3
      %p280 = pnand %p278, %p279
      %p281 = pneg %p280
      // Predicated region
      $region37: #{tpu_custom_call.1} parent=5 // pred_check
        _
      $region38: #{tpu_custom_call.1} parent=5 // pred_check_branch
        %283 = sbr.rel (%p280) target = $region40
      $region39: #{tpu_custom_call.1} parent=5 // pred_region
        %s284 = ssub.s32 %s18, 1
        %s285 = sand.u32 %s52, 1
        %s286 = scalar_lea.sflag [#allocation3], %s285
        %s287 = sand.u32 %s52, 1
        %s288 = smul.addr %s287, 8
        %s289 = scalar_lea.vmem [#allocation2], %s288
        // Predicated region
        $region41: #{tpu_custom_call.1} parent=39 // pred_check
          %p290 = pneg %p65
        $region42: #{tpu_custom_call.1} parent=39 // pred_check_branch
          %292 = sbr.rel (%p290) target = $region44
        $region43: #{tpu_custom_call.1} parent=39 // pred_region
          %293 = dma.done %s286, 128
        $region44: #{tpu_custom_call.1} parent=39 // pred_fallthru
          _
        // Predicated region
        $region45: #{tpu_custom_call.1} parent=39 // pred_check
          %p294 = pneg %p91
        $region46: #{tpu_custom_call.1} parent=39 // pred_check_branch
          %296 = sbr.rel (%p294) target = $region48
        $region47: #{tpu_custom_call.1} parent=39 // pred_region
          %297 = dma.done [#allocation6], 256
        $region48: #{tpu_custom_call.1} parent=39 // pred_fallthru
          _
        // Predicated region
        $region49: #{tpu_custom_call.1} parent=39 // pred_check
          %p298 = pneg %p169
        $region50: #{tpu_custom_call.1} parent=39 // pred_check_branch
          %300 = sbr.rel (%p298) target = $region52
        $region51: #{tpu_custom_call.1} parent=39 // pred_region
          %301 = dma.done [#allocation6], 128
        $region52: #{tpu_custom_call.1} parent=39 // pred_fallthru
          _
        %s302 = sand.u32 %s52, 1
        %s303 = scalar_lea.sflag [#allocation3], %s302
        %s304 = sand.u32 %s52, 1
        %s305 = smul.addr %s304, 8
        %s306 = scalar_lea.vmem [#allocation2], %s305
        %p307 = pneg %p65
        %p308 = pneg %p62
        %p309 = pneg %p91
        %p310 = pneg %p88
        %p311 = scmp.lt.s32.totalorder %s30, 0
        %s312 = scalar_select %p311, %s30, 0
        %s313 = scalar_lea.vmem %s2, %s312
        %p314 = pneg %p117
        %p315 = pneg %p114
        %p316 = scmp.lt.s32.totalorder %s28, 0
        %s317 = scalar_select %p316, %s28, 0
        %s318 = smul.addr %s317, 8
        %s319 = scalar_lea.vmem %s3, %s318
        %p320 = pneg %p143
        %p321 = pneg %p140
        %p322 = pneg %p169
        %p323 = pneg %p166
        %p324 = pneg %p199
        %p325 = pneg %p196
        %s326 = sand.u32 %s186, 1
        %s327 = scalar_lea.sflag [#allocation4], %s326
        %s328 = sand.u32 %s186, 1
        %s329 = smul.addr %s328, 8
        %s330 = scalar_lea.vmem [#allocation8], %s329
        %p331 = scmp.lt.s32.totalorder %s30, 0
        %s332 = scalar_select %p331, %s30, 0
        %s333 = scalar_lea.vmem %s2, %s332
        %p334 = scmp.lt.s32.totalorder %s28, 0
        %s335 = scalar_select %p334, %s28, 0
        %s336 = smul.addr %s335, 8
        %s337 = scalar_lea.vmem %s3, %s336
        %v339 = vld [vmem:[%s289] sm:$0xff]
        %v340 = vpack.c.bf16 %v339, %v339
        %v341 = vld [vmem:[#allocation5] sm:$0xf]
        %v342 = vld [vmem:[#allocation5 + $0x4] sm:$0xf]
        %v343 = vld [vmem:[#allocation5 + $0x8] sm:$0xf]
        %v344 = vld [vmem:[#allocation5 + $0xc] sm:$0xf]
        %v345 = vld [vmem:[%s333] sm:$0x1]
        %v347 = vlaneseq
        %v348 = vshrl.u32 %v347, 7
        %v349 = vsub.s32 0, %v348
        %v350 = vrot.slane %v345, %v349
        %v356 = vunpack.c.l.b16 %v341
        %v357 = vunpack.c.l.b16 %v342
        %v358 = vunpack.c.l.b16 %v343
        %v359 = vunpack.c.l.b16 %v344
        %v360 = vpack.c.b16 %v357, %v356
        %v361 = vpack.c.b16 %v359, %v358
        %vm364 = vcmask 261120
        %v366 = vsel %vm364, %v340, 0
        %368 = vmatprep.subr.bf16.mxu0 0
        %369 = vmatpush1.bf16.msra.mxu0 %v360
        %370 = vmatprep.subr.bf16.mxu0 0
        %371 = vmatpush1.bf16.msra.mxu0 %v361
        %372 = vmatprep.subr.bf16.mxu0 0
        %373 = vmatpush1.bf16.msra.mxu0 0
        %374 = vmatprep.subr.bf16.mxu0 0
        %375 = vmatpush1.bf16.msra.mxu0 0
        %376 = vmatprep.subr.bf16.mxu0 0
        %377 = vmatpush1.bf16.msra.mxu0 0
        %378 = vmatprep.subr.bf16.mxu0 0
        %379 = vmatpush1.bf16.msra.mxu0 0
        %380 = vmatprep.subr.bf16.mxu0 0
        %381 = vmatpush1.bf16.msra.mxu0 0
        %382 = vmatprep.subr.bf16.mxu0 0
        %383 = vmatpush1.bf16.msra.mxu0 0
        %384 = vmatprep.subr.bf16.mxu0 0
        %385 = vmatpush1.bf16.msra.mxu0 0
        %386 = vmatprep.subr.bf16.mxu0 0
        %387 = vmatpush1.bf16.msra.mxu0 0
        %388 = vmatprep.subr.bf16.mxu0 0
        %389 = vmatpush1.bf16.msra.mxu0 0
        %390 = vmatprep.subr.bf16.mxu0 0
        %391 = vmatpush1.bf16.msra.mxu0 0
        %392 = vmatprep.subr.bf16.mxu0 0
        %393 = vmatpush1.bf16.msra.mxu0 0
        %394 = vmatprep.subr.bf16.mxu0 0
        %395 = vmatpush1.bf16.msra.mxu0 0
        %396 = vmatprep.subr.bf16.mxu0 0
        %397 = vmatpush1.bf16.msra.mxu0 0
        %398 = vmatprep.subr.bf16.mxu0 0
        %399 = vmatpush1.bf16.msra.mxu0 0
        %400 = vmatprep.mubr.bf16.mxu0 0
        %401 = vmatmul.mubr.bf16.gmra.mrb[0].mxu0 %v366
        %v402 = vpop.f32.mrb[0].mxu0
        %v403 = vadd.f32 %v350, %v402
        %v404 = vpop.f32.mrb[0].mxu0
        %v405 = vpop.f32.mrb[0].mxu0
        %v406 = vpop.f32.mrb[0].mxu0
        %407 = vdwg.mxu0
        %v408 = vld [vmem:[%s337] sm:$0xff]
        %v409 = vld [vmem:[#allocation7] sm:$0xff]
        %410 = vrot.lane.b32.xlu0 %v403, 4
        %v411 = vpop.permute.xlu0 %410
        %412 = vrot.lane.b32.xlu0 %v403, 124
        %v413 = vpop.permute.xlu0 %412
        %v414 = vlaneseq
        %v415 = vand.u32 %v414, 127
        %vm416 = vcmp.lt.s32.totalorder %v415, 0
        %v417 = vsub.s32 0, %v415
        %v418 = vsel %vm416, %v417, %v415
        %v419 = vshrl.u32 %v418, 3
        %v420 = vand.u32 %v418, 7
        %v421 = vsub.s32 0, %v420
        %v422 = vsel %vm416, %v421, %v420
        %vm423 = vcmp.ne.s32.totalorder %v422, 0
        %vm424 = vcmp.lt.s32.totalorder %v422, 0
        %vm425 = vmand %vm424, %vm423
        %v426 = vadd.s32 %v422, 8
        %v427 = vsel %vm425, %v426, %v422
        %vm428 = vcmp.ge.s32.totalorder %v427, 4
        %v429 = vsel %vm428, %v411, %v413
        %v430 = vmul.f32 %v403, %v408
        %v431 = vmul.f32 %v429, %v409
        %v432 = vadd.f32 %v430, %v431
        %433 = vst [vmem:[%s330] sm:$0xff] %v432
        %s434 = sand.u32 %s186, 1
        %s435 = scalar_lea.sflag [#allocation4], %s434
        %s436 = sand.u32 %s186, 1
        %s437 = smul.addr %s436, 8
        %s438 = scalar_lea.vmem [#allocation8], %s437
        // Predicated region
        $region53: #{tpu_custom_call.1} parent=39 // pred_check
          %p439 = pneg %p196
        $region54: #{tpu_custom_call.1} parent=39 // pred_check_branch
          %441 = sbr.rel (%p439) target = $region56
        $region55: #{tpu_custom_call.1} parent=39 // pred_region
          %s443 = ssub.s32 128, 128
          %444 = vsyncadd %s435, %s443
          %s445 = sadd.s32 %s30, %s28
          %s446 = sadd.s32 %s445, %s29
          %s447 = smul.addr %s446, 128
          %s448 = scalar_lea.hbm %s5, %s447
          %s450 = sshll.u32 %s438, 4
          %s451 = int_to_ptr.vmem [resolvable:$true] %s450
          %453 = dma.vmem_to_hbm [thread:$0]  %s451, 128, %s448, %s435
        $region56: #{tpu_custom_call.1} parent=39 // pred_fallthru
          _
      $region40: #{tpu_custom_call.1} parent=5 // pred_fallthru
        _
      %p454 = scmp.le.s32.totalorder 2, %s18
      // Predicated region
      $region57: #{tpu_custom_call.1} parent=5 // pred_check
        %p455 = pneg %p454
      $region58: #{tpu_custom_call.1} parent=5 // pred_check_branch
        %457 = sbr.rel (%p455) target = $region60
      $region59: #{tpu_custom_call.1} parent=5 // pred_region
        %s458 = ssub.s32 %s18, 2
        // Predicated region
        $region61: #{tpu_custom_call.1} parent=59 // pred_check
          %p459 = pneg %p202
        $region62: #{tpu_custom_call.1} parent=59 // pred_check_branch
          %461 = sbr.rel (%p459) target = $region64
        $region63: #{tpu_custom_call.1} parent=59 // pred_region
          %s462 = sand.u32 %s187, 1
          %s463 = scalar_lea.sflag [#allocation4], %s462
          %s464 = sand.u32 %s187, 1
          %s465 = smul.addr %s464, 8
          %s466 = scalar_lea.vmem [#allocation8], %s465
          %467 = dma.done %s463, 128
        $region64: #{tpu_custom_call.1} parent=59 // pred_fallthru
          _
      $region60: #{tpu_custom_call.1} parent=5 // pred_fallthru
        _
    $region6: #{tpu_custom_call.1} parent=1 // loop_footer
      %s22 = sadd.s32 1, %s18
    $region7: #{tpu_custom_call.1} parent=1 // loop_footer_branch
      %17 = sbr.rel target = $region3
    $region8: #{tpu_custom_call.1} parent=1 // loop_exit
      _
    %468 = vsyncpa [#allocation3], 1
    %s469 = scalar_lea.sflag [#allocation3], 1
    %470 = vsyncpa %s469, 1
    %471 = vsyncpa [#allocation6], 1
    %472 = vsyncpa [#allocation4], 1
    %s473 = scalar_lea.sflag [#allocation4], 1
    %474 = vsyncpa %s473, 1

</llo_original>
